<compile_context>
chip_gen: v5e
topology: v5e:2x2
jax: 0.10.0
libtpu: 0.0.40
codegen_flags: <defaults>
</compile_context>

<pallas_src>
import functools

import jax
import jax.numpy as jnp
from jax.experimental import pallas as pl
from jax.experimental.pallas import tpu as pltpu


# ----------------------------- Pallas kernel --------------------------------
def gcn_propagate_kernel(a_ref, x_ref, w_ref, b_ref, out_ref, acc_ref, *, relu):
    """One grid step of  out = act(A_hat @ (x @ W) + b).

    grid = (M_tiles, K_tiles).  A_hat is streamed as (TM, TK) bf16 blocks, the
    node features as (TK, Cin) blocks; W and b stay resident; acc_ref is the
    f32 accumulator that lives across the K (reduction) axis.
    """
    k = pl.program_id(1)

    @pl.when(k == 0)
    def _init():
        acc_ref[...] = jnp.zeros_like(acc_ref)

    # Skinny feature transform (x_tile @ W) in f32, then cast to A_hat's dtype
    # so the big (TM, TK) @ (TK, Cout) matmul runs at full bf16 MXU rate.
    xw = jnp.dot(x_ref[...], w_ref[...], preferred_element_type=jnp.float32)
    acc_ref[...] += jnp.dot(a_ref[...], xw.astype(a_ref.dtype),
                            preferred_element_type=jnp.float32)

    @pl.when(k == pl.num_programs(1) - 1)
    def _finalize():
        r = acc_ref[...] + b_ref[...]
        if relu:
            r = jnp.maximum(r, 0.0)
        out_ref[...] = r.astype(out_ref.dtype)


def _round_up(x, m):
    return (x + m - 1) // m * m


def _plan_tiles(n):
    """Return (padded_n, tm, tk).

    Small graphs: a single full block per axis (full-dim blocks are always
    legal).  Large graphs: 256 x 512 tiles — multiples of (8,128) for v5e's
    4x128 MXU, multiples of 256 for v6e/v7x's 2x256 MXU, ~256 KiB per bf16
    A_hat buffer so double-buffering fits every generation's VMEM.
    """
    if n <= 512:
        return n, n, n
    tm, tk = 256, 512
    return _round_up(n, 512), tm, tk


def gcn_layer(a_hat, x, w, b, *, relu, tm, tk):
    """Tiled, pipelined  act(A_hat @ (x @ W) + b)  as one pallas_call."""
    n = a_hat.shape[0]
    cin = x.shape[1]
    cout = w.shape[1]
    m_tiles = n // tm
    k_tiles = n // tk

    kernel = functools.partial(gcn_propagate_kernel, relu=relu)

    a_bytes = n * n * a_hat.dtype.itemsize
    flops = 2 * n * n * cout + 2 * m_tiles * n * cin * cout
    bytes_accessed = (a_bytes                              # one full pass over A_hat
                      + m_tiles * n * cin * x.dtype.itemsize   # x/h re-streamed per row tile
                      + (w.size + b.size + n * cout) * 4)

    return pl.pallas_call(
        kernel,
        out_shape=jax.ShapeDtypeStruct((n, cout), jnp.float32),
        grid_spec=pltpu.PrefetchScalarGridSpec(
            num_scalar_prefetch=0,
            grid=(m_tiles, k_tiles),
            in_specs=[
                pl.BlockSpec((tm, tk), lambda i, k: (i, k)),     # A_hat tile (bf16)
                pl.BlockSpec((tk, cin), lambda i, k: (k, 0)),    # node-feature rows
                pl.BlockSpec((cin, cout), lambda i, k: (0, 0)),  # weight (resident)
                pl.BlockSpec((1, cout), lambda i, k: (0, 0)),    # bias (resident)
            ],
            out_specs=pl.BlockSpec((tm, cout), lambda i, k: (i, 0)),  # stationary over k
            scratch_shapes=[pltpu.VMEM((tm, cout), jnp.float32)],
        ),
        compiler_params=pltpu.CompilerParams(
            dimension_semantics=("parallel", "arbitrary"),
            vmem_limit_bytes=32 * 1024 * 1024,
        ),
        cost_estimate=pl.CostEstimate(
            flops=int(flops), transcendentals=0, bytes_accessed=int(bytes_accessed)),
    )(a_hat, x, w, b)


def recon_encoder_forward(a_hat, x, params):
    """Fused GCN-VAE encoder forward.  Returns (z_mu, z_logstd)."""
    n = x.shape[0]
    latent = params["wmu"].shape[1]

    n_pad, tm, tk = _plan_tiles(n)
    a_bf16 = a_hat.astype(jnp.bfloat16)       # only O(N^2) operand -> bf16
    if n_pad != n:
        a_bf16 = jnp.pad(a_bf16, ((0, n_pad - n), (0, n_pad - n)))
        x = jnp.pad(x, ((0, n_pad - n), (0, 0)))

    # Fuse mu / logstd heads: one A_hat pass, one lane-denser (N, 2*latent) output.
    w_heads = jnp.concatenate([params["wmu"], params["wls"]], axis=1)
    b_heads = jnp.concatenate([params["bmu"], params["bls"]], axis=1)

    h = gcn_layer(a_bf16, x, params["w1"], params["b1"], relu=True, tm=tm, tk=tk)
    z = gcn_layer(a_bf16, h, w_heads, b_heads, relu=False, tm=tm, tk=tk)

    z_mu = z[:n, :latent]
    z_logstd = z[:n, latent:2 * latent]
    return z_mu, z_logstd


# ------------------------------- JAX glue ------------------------------------
# TODO(synk): dense A_hat construction (PyG gcn_norm / sparse scatter over
# edge_index) stays in plain JAX; the Pallas kernels cover the dense forward.
def build_gcn_adj(edge_index, num_nodes):
    """Dense D^{-1/2}(A+I)D^{-1/2} matching PyG gcn_norm (add_self_loops=True)."""
    src = edge_index[0]
    dst = edge_index[1]
    loop = jnp.arange(num_nodes, dtype=edge_index.dtype)
    src = jnp.concatenate([src, loop])
    dst = jnp.concatenate([dst, loop])
    a = jnp.zeros((num_nodes, num_nodes), jnp.float32).at[dst, src].add(1.0)
    deg = a.sum(axis=1)                                   # in-degree at target
    dinv = jnp.where(deg > 0, 1.0 / jnp.sqrt(deg), 0.0)
    return dinv[:, None] * a * dinv[None, :]


def glorot(key, fan_in, fan_out):
    limit = jnp.sqrt(6.0 / (fan_in + fan_out))
    return jax.random.uniform(key, (fan_in, fan_out), jnp.float32, -limit, limit)


def init_params(key, in_channels, hidden_size, latent_size):
    k1, k2, k3 = jax.random.split(key, 3)
    return {
        "w1":  glorot(k1, in_channels, hidden_size),
        "b1":  jnp.zeros((1, hidden_size), jnp.float32),
        "wmu": glorot(k2, hidden_size, latent_size),
        "bmu": jnp.zeros((1, latent_size), jnp.float32),
        "wls": glorot(k3, hidden_size, latent_size),
        "bls": jnp.zeros((1, latent_size), jnp.float32),
    }


def recon_encoder_apply(params, x, edge_index, y_edge_index):
    # combined_edge_index = cat((edge_index, y_edge_index), dim=1)
    combined = jnp.concatenate([edge_index, y_edge_index], axis=1)
    a_hat = build_gcn_adj(combined, x.shape[0])
    return recon_encoder_forward(a_hat, x, params)


# Pure-JAX (f32) reference for sanity checking.
def recon_encoder_ref(params, x, edge_index, y_edge_index):
    combined = jnp.concatenate([edge_index, y_edge_index], axis=1)
    a_hat = build_gcn_adj(combined, x.shape[0])
    h = jnp.maximum(a_hat @ (x @ params["w1"]) + params["b1"], 0.0)
    z_mu = a_hat @ (h @ params["wmu"]) + params["bmu"]
    z_ls = a_hat @ (h @ params["wls"]) + params["bls"]
    return z_mu, z_ls


if __name__ == "__main__":
    num_nodes, in_channels, hidden_size, latent_size = 16, 8, 32, 16
    num_edges, num_y_edges = 24, 8

    key = jax.random.PRNGKey(0)
    k_x, k_e, k_ye, k_p = jax.random.split(key, 4)

    x = jax.random.normal(k_x, (num_nodes, in_channels), jnp.float32)
    edge_index = jax.random.randint(k_e, (2, num_edges), 0, num_nodes, jnp.int32)
    y_edge_index = jax.random.randint(k_ye, (2, num_y_edges), 0, num_nodes, jnp.int32)
    params = init_params(k_p, in_channels, hidden_size, latent_size)

    z_mu, z_logstd = recon_encoder_apply(params, x, edge_index, y_edge_index)
    jax.block_until_ready((z_mu, z_logstd))

    z_mu_ref, z_ls_ref = recon_encoder_ref(params, x, edge_index, y_edge_index)
    assert z_mu.shape == (num_nodes, latent_size)
    assert z_logstd.shape == (num_nodes, latent_size)
    # A_hat is streamed in bf16 (f32 accumulation), so tolerance is loosened
    # vs. the pure-f32 reference.
    assert jnp.allclose(z_mu, z_mu_ref, atol=5e-2, rtol=5e-2)
    assert jnp.allclose(z_logstd, z_ls_ref, atol=5e-2, rtol=5e-2)

    print("KERNEL_OK")
</pallas_src>

<mosaic_0001>
module attributes {stable_mosaic.version = 11 : i64} {
  func.func @gcn_propagate_kernel(%arg0: i32, %arg1: i32, %arg2: memref<16x16xbf16, #tpu.memory_space<vmem>>, %arg3: memref<16x8xf32, #tpu.memory_space<vmem>>, %arg4: memref<8x32xf32, #tpu.memory_space<vmem>>, %arg5: memref<1x32xf32, #tpu.memory_space<vmem>>, %arg6: memref<16x32xf32, #tpu.memory_space<vmem>>, %arg7: memref<16x32xf32, #tpu.memory_space<vmem>>) attributes {dimension_semantics = [#tpu.dimension_semantics<parallel>, #tpu.dimension_semantics<arbitrary>], iteration_bounds = array<i64: 1, 1>, scalar_prefetch = 0 : i64, scratch_operands = 1 : i64, tpu.core_type = #tpu.core_type<tc>, window_params = [{transform_indices = @transform_0, window_bounds = array<i64: 16, 16>}, {transform_indices = @transform_1, window_bounds = array<i64: 16, 8>}, {pipeline_mode = #tpu.pipeline_mode<synchronous>, transform_indices = @transform_2, window_bounds = array<i64: 8, 32>}, {pipeline_mode = #tpu.pipeline_mode<synchronous>, transform_indices = @transform_3, window_bounds = array<i64: 1, 32>}, {transform_indices = @transform_4, window_bounds = array<i64: 16, 32>}]} {
    %c0_i32 = arith.constant 0 : i32
    %0 = arith.cmpi eq, %arg1, %c0_i32 : i32
    %1 = arith.extui %0 : i1 to i32
    %c0_i32_0 = arith.constant 0 : i32
    %2 = arith.cmpi ne, %1, %c0_i32_0 : i32
    scf.if %2 {
      %cst_13 = arith.constant 0.000000e+00 : f32
      %15 = vector.broadcast %cst_13 : f32 to vector<16x32xf32>
      %c0_14 = arith.constant 0 : index
      %c0_15 = arith.constant 0 : index
      %16 = vector.load %arg7[%c0_14, %c0_15] : memref<16x32xf32, #tpu.memory_space<vmem>>, vector<16x32xf32>
      tpu.vector_store %arg7[%c0_14, %c0_15], %15 {strides = array<i32>} : memref<16x32xf32, #tpu.memory_space<vmem>>, vector<16x32xf32>,
    } else {
    }
    %c0 = arith.constant 0 : index
    %c0_1 = arith.constant 0 : index
    %3 = vector.load %arg3[%c0, %c0_1] : memref<16x8xf32, #tpu.memory_space<vmem>>, vector<16x8xf32>
    %c0_2 = arith.constant 0 : index
    %c0_3 = arith.constant 0 : index
    %4 = vector.load %arg4[%c0_2, %c0_3] : memref<8x32xf32, #tpu.memory_space<vmem>>, vector<8x32xf32>
    %cst = arith.constant dense<0.000000e+00> : vector<16x32xf32>
    %5 = tpu.matmul %3, %4, %cst {dimension_numbers = #tpu.dot_dimension_numbers<[1], [0], [0], [1], [0, 0, 1, 1], [], []>} : vector<16x8xf32>, vector<8x32xf32>, vector<16x32xf32> -> vector<16x32xf32>
    %c0_4 = arith.constant 0 : index
    %c0_5 = arith.constant 0 : index
    %6 = vector.load %arg7[%c0_4, %c0_5] : memref<16x32xf32, #tpu.memory_space<vmem>>, vector<16x32xf32>
    %c0_6 = arith.constant 0 : index
    %c0_7 = arith.constant 0 : index
    %7 = vector.load %arg2[%c0_6, %c0_7] : memref<16x16xbf16, #tpu.memory_space<vmem>>, vector<16x16xbf16>
    %8 = arith.truncf %5 : vector<16x32xf32> to vector<16x32xbf16>
    %cst_8 = arith.constant dense<0.000000e+00> : vector<16x32xf32>
    %9 = tpu.matmul %7, %8, %cst_8 {dimension_numbers = #tpu.dot_dimension_numbers<[1], [0], [0], [1], [0, 0, 1, 1], [], []>} : vector<16x16xbf16>, vector<16x32xbf16>, vector<16x32xf32> -> vector<16x32xf32>
    %10 = arith.addf %6, %9 : vector<16x32xf32>
    %c0_9 = arith.constant 0 : index
    %c0_10 = arith.constant 0 : index
    %11 = vector.load %arg7[%c0_9, %c0_10] : memref<16x32xf32, #tpu.memory_space<vmem>>, vector<16x32xf32>
    tpu.vector_store %arg7[%c0_9, %c0_10], %10 {strides = array<i32>} : memref<16x32xf32, #tpu.memory_space<vmem>>, vector<16x32xf32>,
    %c0_i32_11 = arith.constant 0 : i32
    %12 = arith.cmpi eq, %arg1, %c0_i32_11 : i32
    %13 = arith.extui %12 : i1 to i32
    %c0_i32_12 = arith.constant 0 : i32
    %14 = arith.cmpi ne, %13, %c0_i32_12 : i32
    scf.if %14 {
      %c0_13 = arith.constant 0 : index
      %c0_14 = arith.constant 0 : index
      %15 = vector.load %arg7[%c0_13, %c0_14] : memref<16x32xf32, #tpu.memory_space<vmem>>, vector<16x32xf32>
      %c0_15 = arith.constant 0 : index
      %c0_16 = arith.constant 0 : index
      %16 = vector.load %arg5[%c0_15, %c0_16] : memref<1x32xf32, #tpu.memory_space<vmem>>, vector<1x32xf32>
      %17 = vector.broadcast %16 : vector<1x32xf32> to vector<16x32xf32>
      %18 = arith.addf %15, %17 : vector<16x32xf32>
      %cst_17 = arith.constant 0.000000e+00 : f32
      %19 = vector.broadcast %cst_17 : f32 to vector<16x32xf32>
      %20 = arith.maximumf %18, %19 : vector<16x32xf32>
      %c0_18 = arith.constant 0 : index
      %c0_19 = arith.constant 0 : index
      %21 = vector.load %arg6[%c0_18, %c0_19] : memref<16x32xf32, #tpu.memory_space<vmem>>, vector<16x32xf32>
      tpu.vector_store %arg6[%c0_18, %c0_19], %20 {strides = array<i32>} : memref<16x32xf32, #tpu.memory_space<vmem>>, vector<16x32xf32>,
    } else {
    }
    return
  }
  func.func @transform_0(%arg0: i32, %arg1: i32) -> (i32, i32) {
    %c0_i32 = arith.constant 0 : i32
    return %arg0, %arg1 : i32, i32
  }
  func.func @transform_1(%arg0: i32, %arg1: i32) -> (i32, i32) {
    %c0_i32 = arith.constant 0 : i32
    %c0_i32_0 = arith.constant 0 : i32
    return %arg1, %c0_i32 : i32, i32
  }
  func.func @transform_2(%arg0: i32, %arg1: i32) -> (i32, i32) {
    %c0_i32 = arith.constant 0 : i32
    %c0_i32_0 = arith.constant 0 : i32
    %c0_i32_1 = arith.constant 0 : i32
    return %c0_i32, %c0_i32_0 : i32, i32
  }
  func.func @transform_3(%arg0: i32, %arg1: i32) -> (i32, i32) {
    %c0_i32 = arith.constant 0 : i32
    %c0_i32_0 = arith.constant 0 : i32
    %c0_i32_1 = arith.constant 0 : i32
    return %c0_i32, %c0_i32_0 : i32, i32
  }
  func.func @transform_4(%arg0: i32, %arg1: i32) -> (i32, i32) {
    %c0_i32 = arith.constant 0 : i32
    %c0_i32_0 = arith.constant 0 : i32
    return %arg0, %c0_i32 : i32, i32
  }
}

</mosaic_0001>

<llo_original>
// kernel: tpu_custom_call.1
$region0: #{tpu_custom_call.1}
  #allocation0 [shape = 'u32[]', space=smem, size = 0x4, offset = 0x4, fixed_abs, tag = 'smem constant byte address 0x4 - core index']
  #allocation1 [shape = 'u32[72,128]{1,0:T(1,128)}', space=vmem, size = 0x9000, scoped, tag = 'internal scratch']
  #allocation2 [shape = 'f32[16,32]{1,0:T(8,128)}', space=vmem, size = 0x2000, scoped, tag = 'scratch operand']
  %s0 = inlined_call_operand.vmem [shape: bf16[16,16], index: 0, kind: input, shape index: {}]
  %s1 = inlined_call_operand.vmem [shape: f32[16,8], index: 1, kind: input, shape index: {}]
  %s2 = inlined_call_operand.vmem [shape: f32[8,32], index: 2, kind: input, shape index: {}]
  %s3 = inlined_call_operand.vmem [shape: f32[1,32], index: 3, kind: input, shape index: {}]
  %s4 = inlined_call_operand.hbm [shape: f32[16,32], index: 4, kind: output, shape index: {}]
  %s5 = sld [smem:[#allocation0]]
  $region34: #{tpu_custom_call.1} parent=0
    _
  %s7 = ssub.s32 1, %s5
  %s8 = scalar_select 0, %s7, %s5
  $region1: #{tpu_custom_call.1} parent=0
    #allocation3 [shape = 'u8[8192]{0}', space=vmem, size = 0x2000, scoped, tag = 'output window, operand 0, single buffered']
    #allocation4 [shape = 's32[1]{0}', space=sflag, size = 0x4, scoped, tag = 'scoped memory for tpu_custom_call.1']
    %9 = vsyncpa [#allocation4], 0
    // Predicated region
    $region2: #{tpu_custom_call.1} parent=1 // pred_check
      _
    $region3: #{tpu_custom_call.1} parent=1 // pred_check_branch
      %11 = sbr.rel (0) target = $region5
    $region4: #{tpu_custom_call.1} parent=1 // pred_region
      _
    $region5: #{tpu_custom_call.1} parent=1 // pred_fallthru
      _
    // Predicated region
    $region6: #{tpu_custom_call.1} parent=1 // pred_check
      _
    $region7: #{tpu_custom_call.1} parent=1 // pred_check_branch
      %13 = sbr.rel (0) target = $region9
    $region8: #{tpu_custom_call.1} parent=1 // pred_region
      _
    $region9: #{tpu_custom_call.1} parent=1 // pred_fallthru
      _
    // Predicated region
    $region10: #{tpu_custom_call.1} parent=1 // pred_check
      _
    $region11: #{tpu_custom_call.1} parent=1 // pred_check_branch
      %15 = sbr.rel (0) target = $region13
    $region12: #{tpu_custom_call.1} parent=1 // pred_region
      _
    $region13: #{tpu_custom_call.1} parent=1 // pred_fallthru
      _
    // Predicated region
    $region14: #{tpu_custom_call.1} parent=1 // pred_check
      _
    $region15: #{tpu_custom_call.1} parent=1 // pred_check_branch
      %17 = sbr.rel (0) target = $region17
    $region16: #{tpu_custom_call.1} parent=1 // pred_region
      _
    $region17: #{tpu_custom_call.1} parent=1 // pred_fallthru
      _
    %p19 = scmp.eq.s32.totalorder 0, 0
    // Predicated region
    $region18: #{tpu_custom_call.1} parent=1 // pred_check
      %p20 = pneg %p19
    $region19: #{tpu_custom_call.1} parent=1 // pred_check_branch
      %22 = sbr.rel (%p20) target = $region21
    $region20: #{tpu_custom_call.1} parent=1 // pred_region
      %vm23 = vcmask 261120
      %24 = vst.msk [vmem:[#allocation2] sm:$0xff] %vm23, 0.0
      %25 = vst.msk [vmem:[#allocation2 + $0x8] sm:$0xff] %vm23, 0.0
    $region21: #{tpu_custom_call.1} parent=1 // pred_fallthru
      _
    %v26 = vld [vmem:[%s1] sm:$0xff]
    %v27 = vld [vmem:[%s1 + $0x8] sm:$0xff]
    %v28 = vld [vmem:[%s2] sm:$0xff]
    %vm29 = vcmask 64512
    %v31 = vsel %vm29, %v26, 0
    %v34 = vsel %vm29, %v27, 0
    %36 = vmatpush.msra.mxu0 0.0
    %37 = vmatpush.msra.mxu0 0.0
    %38 = vmatpush.msra.mxu0 0.0
    %39 = vmatpush.msra.mxu0 0.0
    %40 = vmatpush.msra.mxu0 0.0
    %41 = vmatpush.msra.mxu0 0.0
    %42 = vmatpush.msra.mxu0 0.0
    %43 = vmatpush.msra.mxu0 0.0
    %44 = vmatpush.msra.mxu0 0.0
    %45 = vmatpush.msra.mxu0 0.0
    %46 = vmatpush.msra.mxu0 0.0
    %47 = vmatpush.msra.mxu0 0.0
    %48 = vmatpush.msra.mxu0 0.0
    %49 = vmatpush.msra.mxu0 0.0
    %50 = vmatpush.msra.mxu0 0.0
    %51 = vmatpush.msra.mxu0 %v28
    %52 = vmatmul.f32.gmra.mxu0 %v31
    %v53 = vpop.f32.mrf.mxu0
    %v54 = vadd.f32 0.0, %v53
    %55 = vmatmul.f32.gmra.mxu0 %v34
    %v56 = vpop.f32.mrf.mxu0
    %v57 = vadd.f32 0.0, %v56
    %58 = vdwg.mxu0
    %v59 = vld [vmem:[#allocation2] sm:$0xff]
    %v60 = vld [vmem:[#allocation2 + $0x8] sm:$0xff]
    %v61 = vld [vmem:[%s0] sm:$0xf]
    %v62 = vld [vmem:[%s0 + $0x4] sm:$0xf]
    %v63 = vpack.c.bf16 %v57, %v54
    %v66 = vunpack.c.l.b16 %v61
    %v67 = vunpack.c.l.b16 %v62
    %v68 = vpack.c.b16 %v67, %v66
    %vm69 = vcmask 130048
    %v71 = vsel %vm69, %v68, 0
    %73 = vmatpush.bf16.msra.mxu0 0
    %74 = vmatpush.bf16.msra.mxu0 0
    %75 = vmatpush.bf16.msra.mxu0 0
    %76 = vmatpush.bf16.msra.mxu0 0
    %77 = vmatpush.bf16.msra.mxu0 0
    %78 = vmatpush.bf16.msra.mxu0 0
    %79 = vmatpush.bf16.msra.mxu0 0
    %80 = vmatpush.bf16.msra.mxu0 %v63
    %81 = vmatmul.bf16.gmra.mxu0 %v71
    %v82 = vpop.f32.mrf.mxu0
    %v83 = vadd.f32 0.0, %v82
    %v84 = vpop.f32.mrf.mxu0
    %v85 = vadd.f32 0.0, %v84
    %86 = vdwg.mxu0
    %v87 = vadd.f32 %v59, %v83
    %v88 = vadd.f32 %v60, %v85
    %vm89 = vcmask 261120
    %90 = vst.msk [vmem:[#allocation2] sm:$0xff] %vm89, %v87
    %91 = vst.msk [vmem:[#allocation2 + $0x8] sm:$0xff] %vm89, %v88
    // Predicated region
    $region22: #{tpu_custom_call.1} parent=1 // pred_check
      %p92 = pneg %p19
    $region23: #{tpu_custom_call.1} parent=1 // pred_check_branch
      %94 = sbr.rel (%p92) target = $region25
    $region24: #{tpu_custom_call.1} parent=1 // pred_region
      %v95 = vld [vmem:[#allocation2] sm:$0xff]
      %v96 = vld [vmem:[#allocation2 + $0x8] sm:$0xff]
      %v97 = vld [vmem:[%s3] sm:$0x1]
      %v99 = vperm.slane %v97, 0
      %v101 = vadd.f32 %v95, %v99
      %v102 = vadd.f32 %v96, %v99
      %v103 = vmax.f32 %v101, 0.0
      %v104 = vmax.f32 %v102, 0.0
      %105 = vst.msk [vmem:[#allocation3] sm:$0xff] %vm89, %v103
      %106 = vst.msk [vmem:[#allocation3 + $0x8] sm:$0xff] %vm89, %v104
    $region25: #{tpu_custom_call.1} parent=1 // pred_fallthru
      _
    // Predicated region
    $region26: #{tpu_custom_call.1} parent=1 // pred_check
      _
    $region27: #{tpu_custom_call.1} parent=1 // pred_check_branch
      %108 = sbr.rel (0) target = $region29
    $region28: #{tpu_custom_call.1} parent=1 // pred_region
      %110 = vsyncadd [#allocation4], 0
      %s111 = sshll.u32 [#allocation3], 4
      %s112 = int_to_ptr.vmem [resolvable:$true] %s111
      %s113 = sshll.u32 %s4, 4
      %s114 = int_to_ptr.hbm [resolvable:$true] %s113
      %119 = dma.vmem_to_hbm [thread:$0]  %s112, 256, %s114, [#allocation4], 128, 128, 8
    $region29: #{tpu_custom_call.1} parent=1 // pred_fallthru
      _
    // Predicated region
    $region30: #{tpu_custom_call.1} parent=1 // pred_check
      _
    $region31: #{tpu_custom_call.1} parent=1 // pred_check_branch
      %121 = sbr.rel (0) target = $region33
    $region32: #{tpu_custom_call.1} parent=1 // pred_region
      %123 = dma.done [#allocation4], 256
    $region33: #{tpu_custom_call.1} parent=1 // pred_fallthru
      _
    %124 = vsyncpa [#allocation4], 1

</llo_original>
